<compile_context>
chip_gen: v5e
topology: v5e:2x2
jax: 0.10.0
libtpu: 0.0.40
codegen_flags: <defaults>
</compile_context>

<pallas_src>
import numpy as np
import jax
import jax.numpy as jnp
from jax import lax
from jax.experimental import pallas as pl
from jax.experimental.pallas import tpu as pltpu

EPS = 1e-8


# ---------------------------------------------------------------------------
# Trace-time (NumPy) constants
# ---------------------------------------------------------------------------
def _hann_window_np(win_length, n_fft):
    n = np.arange(win_length, dtype=np.float64)
    w = 0.5 - 0.5 * np.cos(2.0 * np.pi * n / win_length)      # periodic hann (torch default)
    if win_length < n_fft:                                    # torch.istft centers a short window
        pad_l = (n_fft - win_length) // 2
        w = np.pad(w, (pad_l, n_fft - win_length - pad_l))
    return w                                                  # (n_fft,)


def _fused_idft_basis(n_fft, win_np, dtype):
    """Single (2F, n_fft) basis: rows [0:F) = cos part, rows [F:2F) = -sin part,
    synthesis window folded in. Matches onesided irfft (Im of DC/Nyquist drops out)."""
    F = n_fft // 2 + 1
    k = np.arange(F, dtype=np.float64)[:, None]
    n = np.arange(n_fft, dtype=np.float64)[None, :]
    coef = np.where((k == 0) | (k == n_fft // 2), 1.0, 2.0)
    ang = 2.0 * np.pi * k * n / n_fft
    C = coef * np.cos(ang) / n_fft * win_np[None, :]
    S = -coef * np.sin(ang) / n_fft * win_np[None, :]
    return jnp.asarray(np.concatenate([C, S], axis=0), dtype)   # (2F, n_fft)


def _inv_window_envelope(win_np, n_fft, hop, n_frames, start, length):
    """1 / OLA(win^2) over the retained [start, start+length) samples (trace-time constant)."""
    L_full = n_fft + hop * (n_frames - 1)
    wsq = np.zeros(L_full, dtype=np.float64)
    w2 = win_np ** 2
    for t in range(n_frames):
        wsq[t * hop:t * hop + n_fft] += w2
    env = wsq[start:start + length]
    # torch.istft raises if the envelope is ~0; we zero those samples instead of dividing.
    inv = np.where(env > 1e-11, 1.0 / np.maximum(env, 1e-11), 0.0)
    return jnp.asarray(inv[None, :], jnp.float32)               # (1, length)


# ---------------------------------------------------------------------------
# Forward pass
# ---------------------------------------------------------------------------
def gagnet_eval(ests, refs, *, n_fft, hop_length, win_length, matmul_dtype=jnp.bfloat16):
    """ests: [num_stages, B, 2, F, T_frames];  refs: [B, L]."""
    ests = ests.astype(jnp.float32)
    refs = refs.astype(jnp.float32)
    S, B, _, F, T = ests.shape
    length = refs.shape[-1]

    N = n_fft
    hop = hop_length
    R = -(-N // hop)                               # chunks of width `hop` per frame (ceil)
    rows = T + R - 1                               # OLA accumulator rows; rows*hop >= L_full
    start = N // 2                                 # center=True trim
    L_full = N + hop * (T - 1)
    assert start + length <= L_full, "istft: requested length exceeds reconstructable samples"

    win_np = _hann_window_np(win_length, N)
    basis = _fused_idft_basis(N, win_np, matmul_dtype)               # (2F, N), window folded in
    invw = _inv_window_envelope(win_np, N, hop, T, start, length)    # (1, length)

    # -------- Kernel 1: compression + fused windowed-iDFT matmul + register OLA --------
    def spec_to_ola_kernel(spec_ref, basis_ref, ola_ref):
        re = spec_ref[0, 0, 0]                     # (F, T)
        im = spec_ref[0, 0, 1]                     # (F, T)
        mag = jnp.sqrt(re * re + im * im)          # |z|
        # (|z|^2*cos(atan2(im,re)), |z|^2*sin(atan2(im,re))) == (re*|z|, im*|z|)
        comp = jnp.concatenate([re * mag, im * mag], axis=0).astype(matmul_dtype)   # (2F, T)
        dn = (((0,), (0,)), ((), ()))              # contract K = 2F (axis 0 of both operands)
        frames = lax.dot_general(comp, basis_ref[...], dimension_numbers=dn,
                                 preferred_element_type=jnp.float32)                # (T, N)
        # Overlap-add in registers: sample s = t*hop + n lands at (row, col) = (s//hop, s%hop).
        # Chunk r of every frame maps to rows [r, r+T); accumulate R shifted terms, store once.
        acc = None
        for r in range(R):
            w = min(hop, N - r * hop)
            chunk = frames[:, r * hop:r * hop + w]                                   # (T, w)
            if w < hop:
                chunk = jnp.concatenate([chunk, jnp.zeros((T, hop - w), jnp.float32)], axis=1)
            parts = []
            if r > 0:
                parts.append(jnp.zeros((r, hop), jnp.float32))
            parts.append(chunk)
            if R - 1 - r > 0:
                parts.append(jnp.zeros((R - 1 - r, hop), jnp.float32))
            term = jnp.concatenate(parts, axis=0) if len(parts) > 1 else parts[0]    # (rows, hop)
            acc = term if acc is None else acc + term
        ola_ref[0] = acc                           # single full-block store per grid step
        # TODO(synk): for production hop (e.g. 100/160 lanes) emit a lane-dense (width-N)
        # store variant; in-kernel (rows,hop)->(rows*hop,) flattening is avoided here for
        # Mosaic reshape-lowering safety.  Likewise: tile T on an "arbitrary" axis for very
        # long signals (v7x 64 MiB VMEM) and group G batch rows per step to raise MXU M at
        # tiny T; pltpu.CORE_PARALLEL / pl.core_map for explicit v7x 2-TC sharding.

    bytes1 = (B * 2 * F * T * 4                      # spec (last stage only)
              + 2 * F * N * jnp.dtype(matmul_dtype).itemsize
              + B * rows * hop * 4)
    cost1 = pl.CostEstimate(
        flops=int(B * (2 * (2 * F) * T * N + 10 * F * T + R * rows * hop)),
        transcendentals=int(B * F * T),
        bytes_accessed=int(bytes1),
    )

    ola = pl.pallas_call(
        spec_to_ola_kernel,
        out_shape=jax.ShapeDtypeStruct((B, rows, hop), jnp.float32),
        grid=(B,),
        in_specs=[
            # Index the last stage directly: ests[-1] is never materialized in HBM.
            pl.BlockSpec((1, 1, 2, F, T), lambda b: (S - 1, b, 0, 0, 0)),
            pl.BlockSpec((2 * F, N), lambda b: (0, 0)),
        ],
        out_specs=pl.BlockSpec((1, rows, hop), lambda b: (b, 0, 0)),
        compiler_params=pltpu.CompilerParams(dimension_semantics=("parallel",)),
        cost_estimate=cost1,
    )(ests, basis)

    # Contiguous reshape (free bitcast in XLA); trim + envelope fused into the SI-SDR kernel.
    ola_flat = ola.reshape(B, rows * hop)            # (B, rows*hop), un-trimmed/un-normalized

    # -------- Kernel 2: center-trim + 1/OLA(win^2) + SI-SDR (zero-mean, take_log) --------
    def sisdr_kernel(est_ref, tgt_ref, invw_ref, loss_ref):
        est = est_ref[...][:, start:start + length] * invw_ref[...]   # trim + normalize
        tgt = tgt_ref[...]
        est = est - jnp.mean(est, axis=1, keepdims=True)
        tgt = tgt - jnp.mean(tgt, axis=1, keepdims=True)
        dot = jnp.sum(est * tgt, axis=1, keepdims=True)
        s_e = jnp.sum(tgt * tgt, axis=1, keepdims=True) + EPS
        alpha = dot * pl.reciprocal(s_e, approx=True)   # per-row scalar, no length-wide divide
        scaled = alpha * tgt
        e_noise = est - scaled
        num = jnp.sum(scaled * scaled, axis=1, keepdims=True)
        den = jnp.sum(e_noise * e_noise, axis=1, keepdims=True) + EPS
        loss_ref[...] = 10.0 * jnp.log10(num / den + EPS)             # (1, 1)
        # TODO(synk): for very long signals, tile `length` on an "arbitrary" grid axis and
        # accumulate the partial sums in scratch (bounds VMEM on v7x, restores pipelining).

    losses = pl.pallas_call(
        sisdr_kernel,
        out_shape=jax.ShapeDtypeStruct((B, 1), jnp.float32),
        grid=(B,),
        in_specs=[
            pl.BlockSpec((1, rows * hop), lambda b: (b, 0)),
            pl.BlockSpec((1, length), lambda b: (b, 0)),
            pl.BlockSpec((1, length), lambda b: (0, 0)),
        ],
        out_specs=pl.BlockSpec((1, 1), lambda b: (b, 0)),
        compiler_params=pltpu.CompilerParams(dimension_semantics=("parallel",)),
    )(ola_flat, refs, invw)

    return -jnp.mean(losses)                         # reduction='mean', then negated


if __name__ == "__main__":
    # Small consistent shapes:  n_fft=32, hop=16, win=32  ->  F = 17 bins
    # signal length L=128 -> T_frames = L//hop + 1 = 9 (center=True STFT convention)
    n_fft, hop_length, win_length = 32, 16, 32
    B, L = 2, 128
    num_stages = 2
    F = n_fft // 2 + 1
    T = L // hop_length + 1

    key = jax.random.PRNGKey(0)
    k1, k2 = jax.random.split(key)
    ests = jax.random.normal(k1, (num_stages, B, 2, F, T), dtype=jnp.float32)
    refs = jax.random.normal(k2, (B, L), dtype=jnp.float32)

    loss = gagnet_eval(ests, refs, n_fft=n_fft, hop_length=hop_length, win_length=win_length)
    jax.block_until_ready(loss)
    assert jnp.isfinite(loss)
    print("KERNEL_OK")
</pallas_src>

<mosaic_0001>
module attributes {stable_mosaic.version = 11 : i64} {
  func.func @spec_to_ola_kernel(%arg0: i32, %arg1: memref<1x1x2x17x9xf32, #tpu.memory_space<vmem>>, %arg2: memref<34x32xbf16, #tpu.memory_space<vmem>>, %arg3: memref<1x10x16xf32, #tpu.memory_space<vmem>>) attributes {dimension_semantics = [#tpu.dimension_semantics<parallel>], iteration_bounds = array<i64: 2>, scalar_prefetch = 0 : i64, scratch_operands = 0 : i64, tpu.core_type = #tpu.core_type<tc>, window_params = [{transform_indices = @transform_0, window_bounds = array<i64: 1, 1, 2, 17, 9>}, {pipeline_mode = #tpu.pipeline_mode<synchronous>, transform_indices = @transform_1, window_bounds = array<i64: 34, 32>}, {transform_indices = @transform_2, window_bounds = array<i64: 1, 10, 16>}]} {
    %c0 = arith.constant 0 : index
    %c0_0 = arith.constant 0 : index
    %c0_1 = arith.constant 0 : index
    %c0_2 = arith.constant 0 : index
    %c0_3 = arith.constant 0 : index
    %0 = vector.load %arg1[%c0, %c0_0, %c0_1, %c0_2, %c0_3] : memref<1x1x2x17x9xf32, #tpu.memory_space<vmem>>, vector<1x1x1x17x9xf32>
    %1 = vector.shape_cast %0 : vector<1x1x1x17x9xf32> to vector<17x9xf32>
    %c0_4 = arith.constant 0 : index
    %c0_5 = arith.constant 0 : index
    %c1 = arith.constant 1 : index
    %c0_6 = arith.constant 0 : index
    %c0_7 = arith.constant 0 : index
    %2 = vector.load %arg1[%c0_4, %c0_5, %c1, %c0_6, %c0_7] : memref<1x1x2x17x9xf32, #tpu.memory_space<vmem>>, vector<1x1x1x17x9xf32>
    %3 = vector.shape_cast %2 : vector<1x1x1x17x9xf32> to vector<17x9xf32>
    %4 = arith.mulf %1, %1 : vector<17x9xf32>
    %5 = arith.mulf %3, %3 : vector<17x9xf32>
    %6 = arith.addf %4, %5 : vector<17x9xf32>
    %7 = math.sqrt %6 : vector<17x9xf32>
    %8 = arith.mulf %1, %7 : vector<17x9xf32>
    %9 = arith.mulf %3, %7 : vector<17x9xf32>
    %10 = tpu.concatenate %8, %9 in 0 : vector<17x9xf32>, vector<17x9xf32> -> vector<34x9xf32>
    %11 = arith.truncf %10 : vector<34x9xf32> to vector<34x9xbf16>
    %c0_8 = arith.constant 0 : index
    %c0_9 = arith.constant 0 : index
    %12 = vector.load %arg2[%c0_8, %c0_9] : memref<34x32xbf16, #tpu.memory_space<vmem>>, vector<34x32xbf16>
    %cst = arith.constant dense<0.000000e+00> : vector<9x32xf32>
    %13 = tpu.matmul %11, %12, %cst {dimension_numbers = #tpu.dot_dimension_numbers<[0], [0], [1], [1], [0, 1, 1, 1], [], []>} : vector<34x9xbf16>, vector<34x32xbf16>, vector<9x32xf32> -> vector<9x32xf32>
    %14 = vector.extract_strided_slice %13 {offsets = [0, 0], sizes = [9, 16], strides = [1, 1]} : vector<9x32xf32> to vector<9x16xf32>
    %cst_10 = arith.constant 0.000000e+00 : f32
    %15 = vector.broadcast %cst_10 : f32 to vector<1x16xf32>
    %16 = tpu.concatenate %14, %15 in 0 : vector<9x16xf32>, vector<1x16xf32> -> vector<10x16xf32>
    %17 = vector.extract_strided_slice %13 {offsets = [0, 16], sizes = [9, 16], strides = [1, 1]} : vector<9x32xf32> to vector<9x16xf32>
    %cst_11 = arith.constant 0.000000e+00 : f32
    %18 = vector.broadcast %cst_11 : f32 to vector<1x16xf32>
    %19 = tpu.concatenate %18, %17 in 0 : vector<1x16xf32>, vector<9x16xf32> -> vector<10x16xf32>
    %20 = arith.addf %16, %19 : vector<10x16xf32>
    %c0_12 = arith.constant 0 : index
    %c0_13 = arith.constant 0 : index
    %c0_14 = arith.constant 0 : index
    %21 = vector.load %arg3[%c0_12, %c0_13, %c0_14] : memref<1x10x16xf32, #tpu.memory_space<vmem>>, vector<1x10x16xf32>
    %22 = vector.shape_cast %21 : vector<1x10x16xf32> to vector<10x16xf32>
    %23 = vector.shape_cast %20 : vector<10x16xf32> to vector<1x10x16xf32>
    tpu.vector_store %arg3[%c0_12, %c0_13, %c0_14], %23 {strides = array<i32>} : memref<1x10x16xf32, #tpu.memory_space<vmem>>, vector<1x10x16xf32>,
    return
  }
  func.func @transform_0(%arg0: i32) -> (i32, i32, i32, i32, i32) {
    %c1_i32 = arith.constant 1 : i32
    %c0_i32 = arith.constant 0 : i32
    %c0_i32_0 = arith.constant 0 : i32
    %c0_i32_1 = arith.constant 0 : i32
    %c0_i32_2 = arith.constant 0 : i32
    return %c1_i32, %arg0, %c0_i32, %c0_i32_0, %c0_i32_1 : i32, i32, i32, i32, i32
  }
  func.func @transform_1(%arg0: i32) -> (i32, i32) {
    %c0_i32 = arith.constant 0 : i32
    %c0_i32_0 = arith.constant 0 : i32
    %c0_i32_1 = arith.constant 0 : i32
    return %c0_i32, %c0_i32_0 : i32, i32
  }
  func.func @transform_2(%arg0: i32) -> (i32, i32, i32) {
    %c0_i32 = arith.constant 0 : i32
    %c0_i32_0 = arith.constant 0 : i32
    %c0_i32_1 = arith.constant 0 : i32
    return %arg0, %c0_i32, %c0_i32_0 : i32, i32, i32
  }
}

</mosaic_0001>

<llo_original>
// kernel: tpu_custom_call.1
$region0: #{tpu_custom_call.1}
  #allocation0 [shape = 'u32[]', space=smem, size = 0x4, offset = 0x4, fixed_abs, tag = 'smem constant byte address 0x4 - core index']
  #allocation1 [shape = 'u32[72,128]{1,0:T(1,128)}', space=vmem, size = 0x9000, scoped, tag = 'internal scratch']
  %s0 = inlined_call_operand.vmem [shape: f32[2,2,2,17,9], index: 0, kind: input, shape index: {}]
  %s1 = inlined_call_operand.vmem [shape: bf16[34,32], index: 1, kind: input, shape index: {}]
  %s2 = inlined_call_operand.vmem [shape: f32[2,10,16], index: 2, kind: output, shape index: {}]
  %s3 = sld [smem:[#allocation0]]
  $region41: #{tpu_custom_call.1} parent=0
    _
  %s5 = ssub.s32 1, %s3
  %s6 = scalar_select 0, %s5, %s3
  loop: start=0, step=1, limit=4
  $region2: #{tpu_custom_call.1} parent=0 // loop_pre_header
    _
  $region3: #{tpu_custom_call.1} parent=0 // loop_header
    %s8 = sphi 0, %s12
    %p9 = scmp.ge.s32.totalorder %s8, 4
    %s18 = sphi 0, %s20
    %s21 = sphi 0, %s18
    %s22 = sphi 0, %s21
    %s38 = sphi 0, %s22
    %s42 = sphi 0, %s42
    %s44 = sphi 0, %s42
    %s45 = sphi 0, %s44
    %s59 = sphi 0, %s45
    %s65 = sphi 0, %s67
    %s68 = sphi 0, %s65
    %s69 = sphi 0, %s68
    %s85 = sphi 0, %s69
  $region4: #{tpu_custom_call.1} parent=0 // loop_header_branch
    %11 = sbr.rel (%p9) target = $region8
  $region5: #{tpu_custom_call.1} parent=0 // loop_body
    %s13 = ssub.s32 %s8, 1
    %s14 = ssub.s32 %s8, 2
    %s15 = sadd.s32 %s8, 1
    %s16 = ssub.s32 %s8, %s15
    %p17 = scmp.eq.s32.totalorder %s16, 0
    %s19 = sadd.s32 %s18, 1
    %s20 = scalar_select %p17, %s18, %s19
    %p23 = pneg %p17
    %p24 = scmp.eq.s32.totalorder %s8, 1
    %p25 = por %p23, %p24
    %p26 = scmp.ne.s32.totalorder %s18, %s21
    %p27 = scmp.eq.s32.totalorder %s8, 0
    %p28 = por %p26, %p27
    %p29 = scmp.ne.s32.totalorder %s18, %s21
    %p30 = scmp.eq.s32.totalorder %s13, 1
    %p31 = por %p29, %p30
    %p32 = scmp.ne.s32.totalorder %s21, %s22
    %p33 = scmp.eq.s32.totalorder %s13, 0
    %p34 = por %p32, %p33
    %p35 = scmp.ne.s32.totalorder %s21, %s22
    %p36 = scmp.eq.s32.totalorder %s14, 1
    %p37 = por %p35, %p36
    %p39 = scmp.ne.s32.totalorder %s22, %s38
    %p40 = scmp.eq.s32.totalorder %s14, 0
    %p41 = por %p39, %p40
    %s43 = sadd.s32 %s42, 1
    %p46 = scmp.eq.s32.totalorder %s8, 1
    %p47 = scmp.ne.s32.totalorder %s42, %s44
    %p48 = scmp.eq.s32.totalorder %s8, 0
    %p49 = por %p47, %p48
    %p50 = scmp.ne.s32.totalorder %s42, %s44
    %p51 = scmp.eq.s32.totalorder %s13, 1
    %p52 = por %p50, %p51
    %p53 = scmp.ne.s32.totalorder %s44, %s45
    %p54 = scmp.eq.s32.totalorder %s13, 0
    %p55 = por %p53, %p54
    %p56 = scmp.ne.s32.totalorder %s44, %s45
    %p57 = scmp.eq.s32.totalorder %s14, 1
    %p58 = por %p56, %p57
    %p60 = scmp.ne.s32.totalorder %s45, %s59
    %p61 = scmp.eq.s32.totalorder %s14, 0
    %p62 = por %p60, %p61
    %s63 = ssub.s32 %s8, %s15
    %p64 = scmp.eq.s32.totalorder %s63, 0
    %s66 = sadd.s32 %s65, 1
    %s67 = scalar_select %p64, %s65, %s66
    %p70 = pneg %p64
    %p71 = scmp.eq.s32.totalorder %s8, 1
    %p72 = por %p70, %p71
    %p73 = scmp.ne.s32.totalorder %s65, %s68
    %p74 = scmp.eq.s32.totalorder %s8, 0
    %p75 = por %p73, %p74
    %p76 = scmp.ne.s32.totalorder %s65, %s68
    %p77 = scmp.eq.s32.totalorder %s13, 1
    %p78 = por %p76, %p77
    %p79 = scmp.ne.s32.totalorder %s68, %s69
    %p80 = scmp.eq.s32.totalorder %s13, 0
    %p81 = por %p79, %p80
    %p82 = scmp.ne.s32.totalorder %s68, %s69
    %p83 = scmp.eq.s32.totalorder %s14, 1
    %p84 = por %p82, %p83
    %p86 = scmp.ne.s32.totalorder %s69, %s85
    %p87 = scmp.eq.s32.totalorder %s14, 0
    %p88 = por %p86, %p87
    %p89 = scmp.le.s32.totalorder 1, %s8
    %p90 = scmp.lt.s32.totalorder %s8, 3
    %p91 = pnand %p89, %p90
    %p92 = pneg %p91
    // Predicated region
    $region9: #{tpu_custom_call.1} parent=5 // pred_check
      _
    $region10: #{tpu_custom_call.1} parent=5 // pred_check_branch
      %94 = sbr.rel (%p91) target = $region12
    $region11: #{tpu_custom_call.1} parent=5 // pred_region
      %s95 = ssub.s32 %s8, 1
      // Predicated region
      $region13: #{tpu_custom_call.1} parent=11 // pred_check
        %p96 = pneg %p55
      $region14: #{tpu_custom_call.1} parent=11 // pred_check_branch
        %98 = sbr.rel (%p96) target = $region16
      $region15: #{tpu_custom_call.1} parent=11 // pred_region
        _
      $region16: #{tpu_custom_call.1} parent=11 // pred_fallthru
        _
    $region12: #{tpu_custom_call.1} parent=5 // pred_fallthru
      _
    %p99 = scmp.lt.s32.totalorder %s8, 2
    // Predicated region
    $region17: #{tpu_custom_call.1} parent=5 // pred_check
      %p100 = pneg %p99
    $region18: #{tpu_custom_call.1} parent=5 // pred_check_branch
      %102 = sbr.rel (%p100) target = $region20
    $region19: #{tpu_custom_call.1} parent=5 // pred_region
      // Predicated region
      $region21: #{tpu_custom_call.1} parent=19 // pred_check
        %p103 = pneg %p28
      $region22: #{tpu_custom_call.1} parent=19 // pred_check_branch
        %105 = sbr.rel (%p103) target = $region24
      $region23: #{tpu_custom_call.1} parent=19 // pred_region
        %p106 = scmp.lt.s32.totalorder %s8, 1
        %s107 = scalar_select %p106, %s8, 1
        %s108 = smul.addr %s107, 6
        %s109 = sadd.s32 %s108, 12
        %s110 = smul.addr %s109, 8
        %s111 = scalar_lea.vmem %s0, %s110
      $region24: #{tpu_custom_call.1} parent=19 // pred_fallthru
        _
    $region20: #{tpu_custom_call.1} parent=5 // pred_fallthru
      _
    %p112 = scmp.le.s32.totalorder 1, %s8
    %p113 = scmp.lt.s32.totalorder %s8, 3
    %p114 = pnand %p112, %p113
    %p115 = pneg %p114
    // Predicated region
    $region25: #{tpu_custom_call.1} parent=5 // pred_check
      _
    $region26: #{tpu_custom_call.1} parent=5 // pred_check_branch
      %117 = sbr.rel (%p114) target = $region28
    $region27: #{tpu_custom_call.1} parent=5 // pred_region
      %s118 = ssub.s32 %s8, 1
      %p119 = scmp.lt.s32.totalorder %s13, 1
      %s120 = scalar_select %p119, %s13, 1
      %s121 = smul.addr %s120, 6
      %s122 = sadd.s32 %s121, 12
      %s123 = smul.addr %s122, 8
      %s124 = scalar_lea.vmem %s0, %s123
      %p125 = pneg %p34
      %p126 = pneg %p31
      %p127 = pneg %p55
      %p128 = pneg %p52
      %p129 = pneg %p81
      %p130 = pneg %p78
      %p131 = scmp.lt.s32.totalorder %s13, 1
      %s132 = scalar_select %p131, %s13, 1
      %s133 = smul.addr %s132, 2
      %s134 = smul.addr %s133, 8
      %s135 = scalar_lea.vmem %s2, %s134
      %p136 = scmp.lt.s32.totalorder %s13, 1
      %s137 = scalar_select %p136, %s13, 1
      %s138 = smul.addr %s137, 6
      %s139 = sadd.s32 %s138, 12
      %s140 = smul.addr %s139, 8
      %s141 = scalar_lea.vmem %s0, %s140
      %p142 = scmp.lt.s32.totalorder %s13, 1
      %s143 = scalar_select %p142, %s13, 1
      %s144 = smul.addr %s143, 2
      %s145 = smul.addr %s144, 8
      %s146 = scalar_lea.vmem %s2, %s145
      %v148 = vld [vmem:[%s141] sm:$0xff]
      %v149 = vld [vmem:[%s141 + $0x8] sm:$0xff]
      %v150 = vld [vmem:[%s141 + $0x10] sm:$0x1]
      %s151 = scalar_lea.vmem %s141, 24
      %v152 = vld [vmem:[%s151] sm:$0xff]
      %v153 = vld [vmem:[%s151 + $0x8] sm:$0xff]
      %v154 = vld [vmem:[%s151 + $0x10] sm:$0x1]
      %v155 = vmul.f32 %v148, %v148
      %v156 = vmul.f32 %v149, %v149
      %v157 = vmul.f32 %v150, %v150
      %v158 = vmul.f32 %v152, %v152
      %v159 = vmul.f32 %v153, %v153
      %v160 = vmul.f32 %v154, %v154
      %v161 = vadd.f32 %v155, %v158
      %v162 = vadd.f32 %v156, %v159
      %v163 = vadd.f32 %v157, %v160
      %v164 = vrsqrt.pop %v161
      %v165 = vmul.f32 %v164, %v161
      %v166 = vmul.f32 %v165, %v164
      %v167 = vmul.f32 0.5, %v166
      %v168 = vsub.f32 1.5, %v167
      %v169 = vmul.f32 %v164, %v168
      %v170 = vmul.f32 %v161, %v169
      %vm171 = vcmp.eq.f32.partialorder %v161, inf
      %v172 = vsel %vm171, %v161, %v170
      %vm173 = vcmp.eq.f32.partialorder %v161, 0.0
      %v174 = vand.u32 %v161, 2147483648
      %v175 = vsel %vm173, %v174, %v172
      %v176 = vrsqrt.pop %v162
      %v177 = vmul.f32 %v176, %v162
      %v178 = vmul.f32 %v177, %v176
      %v179 = vmul.f32 0.5, %v178
      %v180 = vsub.f32 1.5, %v179
      %v181 = vmul.f32 %v176, %v180
      %v182 = vmul.f32 %v162, %v181
      %vm183 = vcmp.eq.f32.partialorder %v162, inf
      %v184 = vsel %vm183, %v162, %v182
      %vm185 = vcmp.eq.f32.partialorder %v162, 0.0
      %v186 = vand.u32 %v162, 2147483648
      %v187 = vsel %vm185, %v186, %v184
      %v188 = vrsqrt.pop %v163
      %v189 = vmul.f32 %v188, %v163
      %v190 = vmul.f32 %v189, %v188
      %v191 = vmul.f32 0.5, %v190
      %v192 = vsub.f32 1.5, %v191
      %v193 = vmul.f32 %v188, %v192
      %v194 = vmul.f32 %v163, %v193
      %vm195 = vcmp.eq.f32.partialorder %v163, inf
      %v196 = vsel %vm195, %v163, %v194
      %vm197 = vcmp.eq.f32.partialorder %v163, 0.0
      %v198 = vand.u32 %v163, 2147483648
      %v199 = vsel %vm197, %v198, %v196
      %v200 = vmul.f32 %v148, %v175
      %v201 = vmul.f32 %v149, %v187
      %v202 = vmul.f32 %v150, %v199
      %v203 = vmul.f32 %v152, %v175
      %v204 = vmul.f32 %v153, %v187
      %v205 = vmul.f32 %v154, %v199
      %vm209 = vcmask 1040384
      %v210 = vrot.slane %v203, 7
      %v211 = vrot.slane %v204, 7
      %v212 = vsel %vm209, %v210, %v211
      %v213 = vrot.slane %v205, 7
      %v214 = vsel %vm209, %v211, %v213
      %v218 = vsel %vm209, %v202, %v210
      %v219 = vpack.c.bf16 %v201, %v200
      %v220 = vpack.c.bf16 %v212, %v218
      %v221 = vpack.c.bf16 %v214, %v214
      %v222 = vld [vmem:[%s1] sm:$0xf]
      %v223 = vld [vmem:[%s1 + $0x4] sm:$0xf]
      %v224 = vld [vmem:[%s1 + $0x8] sm:$0xf]
      %v225 = vld [vmem:[%s1 + $0xc] sm:$0xf]
      %v226 = vld [vmem:[%s1 + $0x10] sm:$0x1]
      %227 = vxpose.xlu0.c.b16.start [1/8] %v219, 128
      %228 = vxpose.xlu0.c.b16.cont [2/8] %v220, 128
      %229 = vxpose.xlu0.c.b16.cont [3/8] %v221, 128
      %230 = vxpose.xlu0.c.b16.cont [4/8] 0, 128
      %231 = vxpose.xlu0.c.b16.cont [5/8] 0, 128
      %232 = vxpose.xlu0.c.b16.cont [6/8] 0, 128
      %233 = vxpose.xlu0.c.b16.cont [7/8] 0, 128
      %234 = vxpose.xlu0.c.b16.end [8/8] 0, 128
      %v235 = vpop.trf.xlu0
      %v236 = vpop.trf.xlu0
      %v237 = vpop.trf.xlu0
      %v238 = vpop.trf.xlu0
      %v239 = vpop.trf.xlu0
      %v240 = vpop.trf.xlu0
      %v241 = vpop.trf.xlu0
      %v242 = vpop.trf.xlu0
      %v248 = vunpack.c.l.b16 %v222
      %v249 = vunpack.c.l.b16 %v223
      %v250 = vunpack.c.l.b16 %v224
      %v251 = vunpack.c.l.b16 %v225
      %v252 = vunpack.c.l.b16 %v226
      %v253 = vpack.c.b16 %v249, %v248
      %v254 = vpack.c.b16 %v251, %v250
      %v255 = vpack.c.b16 %v252, %v252
      %vm258 = vcmask 277504
      %v260 = vsel %vm258, %v235, 0
      %v263 = vsel %vm209, %v255, 0
      %265 = vmatpush.bf16.msra.mxu0 0
      %266 = vmatpush.bf16.msra.mxu0 0
      %267 = vmatpush.bf16.msra.mxu0 0
      %268 = vmatpush.bf16.msra.mxu0 0
      %269 = vmatpush.bf16.msra.mxu0 0
      %270 = vmatpush.bf16.msra.mxu0 %v263
      %271 = vmatpush.bf16.msra.mxu0 %v254
      %272 = vmatpush.bf16.msra.mxu0 %v253
      %273 = vmatmul.bf16.gmra.mxu0 %v260
      %v274 = vpop.f32.mrf.mxu0
      %v275 = vadd.f32 0.0, %v274
      %v276 = vpop.f32.mrf.mxu0
      %v277 = vadd.f32 0.0, %v276
      %278 = vdwg.mxu0
      %v279 = vsel %vm209, %v277, 0.0
      %v282 = vrot.slane %v275, 7
      %v283 = vrot.slane %v277, 7
      %v284 = vsel %vm209, %v282, %v283
      %285 = vrot.lane.b32.xlu0 %v282, 112
      %v286 = vpop.permute.xlu0 %285
      %287 = vrot.lane.b32.xlu0 %v284, 112
      %v288 = vpop.permute.xlu0 %287
      %v291 = vsel %vm209, 0.0, %v286
      %v292 = vadd.f32 %v275, %v291
      %v293 = vadd.f32 %v279, %v288
      %vm294 = vcmask 130048
      %295 = vst.msk [vmem:[%s146] sm:$0xff] %vm294, %v292
      %vm296 = vcmask 123904
      %297 = vst.msk [vmem:[%s146 + $0x8] sm:$0x3] %vm296, %v293
      %p298 = scmp.lt.s32.totalorder %s13, 1
      %s299 = scalar_select %p298, %s13, 1
      %s300 = smul.addr %s299, 2
      %s301 = smul.addr %s300, 8
      %s302 = scalar_lea.vmem %s2, %s301
      // Predicated region
      $region29: #{tpu_custom_call.1} parent=27 // pred_check
        %p303 = pneg %p78
      $region30: #{tpu_custom_call.1} parent=27 // pred_check_branch
        %305 = sbr.rel (%p303) target = $region32
      $region31: #{tpu_custom_call.1} parent=27 // pred_region
        _
      $region32: #{tpu_custom_call.1} parent=27 // pred_fallthru
        _
    $region28: #{tpu_custom_call.1} parent=5 // pred_fallthru
      _
    %p306 = scmp.le.s32.totalorder 2, %s8
    // Predicated region
    $region33: #{tpu_custom_call.1} parent=5 // pred_check
      %p307 = pneg %p306
    $region34: #{tpu_custom_call.1} parent=5 // pred_check_branch
      %309 = sbr.rel (%p307) target = $region36
    $region35: #{tpu_custom_call.1} parent=5 // pred_region
      %s310 = ssub.s32 %s8, 2
      // Predicated region
      $region37: #{tpu_custom_call.1} parent=35 // pred_check
        %p311 = pneg %p84
      $region38: #{tpu_custom_call.1} parent=35 // pred_check_branch
        %313 = sbr.rel (%p311) target = $region40
      $region39: #{tpu_custom_call.1} parent=35 // pred_region
        %p314 = scmp.lt.s32.totalorder %s14, 1
        %s315 = scalar_select %p314, %s14, 1
        %s316 = smul.addr %s315, 2
        %s317 = smul.addr %s316, 8
        %s318 = scalar_lea.vmem %s2, %s317
      $region40: #{tpu_custom_call.1} parent=35 // pred_fallthru
        _
    $region36: #{tpu_custom_call.1} parent=5 // pred_fallthru
      _
  $region6: #{tpu_custom_call.1} parent=0 // loop_footer
    %s12 = sadd.s32 1, %s8
  $region7: #{tpu_custom_call.1} parent=0 // loop_footer_branch
    %7 = sbr.rel target = $region3
  $region8: #{tpu_custom_call.1} parent=0 // loop_exit
    _

</llo_original>
